<compile_context>
chip_gen: v7x
topology: tpu7x:2x2x1
jax: 0.10.0
libtpu: 0.0.40
codegen_flags: <defaults>
</compile_context>

<pallas_src>
import functools

import jax
import jax.numpy as jnp
from jax.experimental import pallas as pl
from jax.experimental.pallas import tpu as pltpu


def _round_up(x, m):
    return ((x + m - 1) // m) * m


# ----------------------------------------------------------------------------
# Fused Pallas kernel: one M-tile of the whole backbone->bones->decoders chain
# ----------------------------------------------------------------------------
def _fused_ltg_kernel(xT_ref, wbb_ref, bbb_ref, wgr_ref, bgr_ref,
                      wdec_ref, bdec_ref, o_ref, *, compute_dtype):
    """All tensors are "channels-first": (C, tm) with the M tile in the lane dim.

    xT_ref  : (Cin*9, tm)       im2col patches (bf16)
    wbb_ref : (Cb, Cin*9)       backbone weight (bf16),  bbb_ref: (Cb, 1) f32
    wgr_ref : (k*Cg, Cb)        concatenated group-bone weights, bgr_ref: (k*Cg, 1)
    wdec_ref: (k*n*Ct, k*Cg)    block-diagonal decoder weights,  bdec_ref: (k*n*Ct, 1)
    o_ref   : (k*n*Ct, tm)      all task outputs, lane-dense
    """
    xT = xT_ref[...]                                                   # (K1, tm)

    # backbone: 3x3 conv (as matmul over im2col patches) + bias + ReLU
    xb = jnp.dot(wbb_ref[...], xT, preferred_element_type=jnp.float32)  # (Cb, tm)
    xb = jnp.maximum(xb + bbb_ref[...], 0.0).astype(compute_dtype)

    # all group bones at once: 1x1 conv + bias + ReLU  (group_regulator == Identity)
    ft = jnp.dot(wgr_ref[...], xb, preferred_element_type=jnp.float32)  # (k*Cg, tm)
    ft = jnp.maximum(ft + bgr_ref[...], 0.0).astype(compute_dtype)

    # all decoders of all groups in one block-diagonal matmul (task_regulator == Identity)
    out = jnp.dot(wdec_ref[...], ft, preferred_element_type=jnp.float32)  # (k*n*Ct, tm)
    out = out + bdec_ref[...]

    o_ref[...] = out.astype(o_ref.dtype)


def fused_forward_T(patches_T, packed, *, tm=256, compute_dtype=jnp.bfloat16):
    """patches_T: (Cin*9, M) f32.  Returns (k*n*Ct, M) f32 (all task outputs)."""
    K1, M = patches_T.shape
    total_out = packed["w_dec"].shape[0]

    # Pad M up to a lane-friendly tile; slice the padding off afterwards.
    M_pad = _round_up(M, 128)
    tm = min(tm, M_pad)
    M_pad = _round_up(M_pad, tm)
    if M_pad != M:
        patches_T = jnp.pad(patches_T, ((0, 0), (0, M_pad - M)))

    xT = patches_T.astype(compute_dtype)
    w_bb = packed["w_bb"].astype(compute_dtype)
    w_gr = packed["w_gr"].astype(compute_dtype)
    w_dec = packed["w_dec"].astype(compute_dtype)
    b_bb, b_gr, b_dec = packed["b_bb"], packed["b_gr"], packed["b_dec"]

    kernel = functools.partial(_fused_ltg_kernel, compute_dtype=compute_dtype)
    out = pl.pallas_call(
        kernel,
        out_shape=jax.ShapeDtypeStruct((total_out, M_pad), jnp.float32),
        grid_spec=pltpu.PrefetchScalarGridSpec(
            num_scalar_prefetch=0,
            grid=(M_pad // tm,),
            in_specs=[
                pl.BlockSpec((K1, tm), lambda i: (0, i)),        # streamed patches tile
                pl.BlockSpec(w_bb.shape, lambda i: (0, 0)),      # tiny constant weights
                pl.BlockSpec(b_bb.shape, lambda i: (0, 0)),
                pl.BlockSpec(w_gr.shape, lambda i: (0, 0)),
                pl.BlockSpec(b_gr.shape, lambda i: (0, 0)),
                pl.BlockSpec(w_dec.shape, lambda i: (0, 0)),
                pl.BlockSpec(b_dec.shape, lambda i: (0, 0)),
            ],
            out_specs=pl.BlockSpec((total_out, tm), lambda i: (0, i)),
        ),
        compiler_params=pltpu.CompilerParams(
            dimension_semantics=("parallel",)),     # both TCs on v7x take M tiles
    )(xT, w_bb, b_bb, w_gr, b_gr, w_dec, b_dec)
    return out[:, :M]


# ----------------------------------------------------------------------------
# Glue: im2col for the 3x3 backbone conv (channels-first / transposed layout)
# ----------------------------------------------------------------------------
def im2col_3x3_T(x):
    """NCHW -> (Cin*9, N*H*W) patches; K1 order = (cin, kh, kw) to match the
    PyTorch weight flattening.  At this toy size the 9x-inflated copy is noise;
    for large N/H/W this should become shift-and-accumulate inside the kernel."""
    N, C, H, W = x.shape
    xp = jnp.pad(x, ((0, 0), (0, 0), (1, 1), (1, 1)))
    patches = [xp[:, :, dh:dh + H, dw:dw + W] for dh in range(3) for dw in range(3)]
    p = jnp.stack(patches, axis=2)                 # (N, C, 9, H, W)
    p = p.reshape(N, C * 9, H, W)
    p = jnp.transpose(p, (1, 0, 2, 3))             # (C*9, N, H, W)
    return p.reshape(C * 9, N * H * W)


# ----------------------------------------------------------------------------
# LearnToGroup forward (JAX/Pallas)
# ----------------------------------------------------------------------------
def learn_to_group_forward(x_nchw, params, temperature=1.0):
    """Returns (task_outputs, grouping, group_matrix), mirroring the PyTorch
    module with sample='softmax', training=True, regularize_grad=None.
    `temperature` is unused on the plain-softmax path (matches F.softmax)."""
    N, Cin, H, W = x_nchw.shape
    cfg = params["config"]
    Ct, n_tasks, k_groups = cfg["Ct"], cfg["n_tasks"], cfg["k_groups"]

    patches_T = im2col_3x3_T(x_nchw)                     # (Cin*9, M)
    out_T = fused_forward_T(patches_T, params["packed"])  # (k*n*Ct, M), lane-dense

    task_outputs = {}
    for g in range(k_groups):
        g_key = f"group_{g}"
        task_outputs[g_key] = {}
        for t in range(n_tasks):
            t_key = f"task_{t}"
            off = (g * n_tasks + t) * Ct
            rows = out_T[off:off + Ct, :]                       # (Ct, N*H*W)
            task_outputs[g_key][t_key] = jnp.transpose(
                rows.reshape(Ct, N, H, W), (1, 0, 2, 3))        # (N, Ct, H, W)

    # sample_task_group: sample='softmax', training=True -> softmax(group_matrix, -1).
    # Plain jnp -- a (3,2) softmax does not deserve its own pallas_call.
    # TODO(synk): gumbel / batch_relaxed / diagonal sampling branches (and the
    #             eval-mode argmax one-hot) need RNG / mode flags; only the
    #             deterministic 'softmax' training branch is implemented.
    grouping = jax.nn.softmax(params["group_matrix"], axis=-1)

    return task_outputs, grouping, params["group_matrix"]


# ----------------------------------------------------------------------------
# Deterministic parameter construction + packing into the fused layout
# ----------------------------------------------------------------------------
def make_params(key, *, Cin=4, Cb=8, Cg=8, Ct=4, k_groups=2, n_tasks=3):
    keys = jax.random.split(key, 64)
    ki = iter(range(64))

    def nrm(shape, scale=0.1):
        return jax.random.normal(keys[next(ki)], shape, jnp.float32) * scale

    # PyTorch-layout parameters
    wb = nrm((Cb, Cin, 3, 3))            # backbone conv weight
    bb = nrm((Cb,))
    gws, gbs, dws, dbs = [], [], [], []
    for _ in range(k_groups):
        gws.append(nrm((Cg, Cb, 1, 1)))
        gbs.append(nrm((Cg,)))
        dws.append([nrm((Ct, Cg, 1, 1)) for _ in range(n_tasks)])
        dbs.append([nrm((Ct,)) for _ in range(n_tasks)])

    # --- packed, fused, outputs-first layouts -------------------------------
    w_bb = wb.reshape(Cb, Cin * 9)                       # (Cb, Cin*9)
    b_bb = bb.reshape(Cb, 1)
    w_gr = jnp.concatenate([gws[g].reshape(Cg, Cb) for g in range(k_groups)],
                           axis=0)                       # (k*Cg, Cb)
    b_gr = jnp.concatenate(gbs, axis=0).reshape(k_groups * Cg, 1)

    # Block-diagonal decoder matrix: rows of group g only see columns of group g.
    total_out = k_groups * n_tasks * Ct
    w_dec = jnp.zeros((total_out, k_groups * Cg), jnp.float32)
    b_dec = jnp.zeros((total_out, 1), jnp.float32)
    for g in range(k_groups):
        blk = jnp.concatenate([dws[g][t].reshape(Ct, Cg) for t in range(n_tasks)],
                              axis=0)                    # (n*Ct, Cg)
        w_dec = w_dec.at[g * n_tasks * Ct:(g + 1) * n_tasks * Ct,
                         g * Cg:(g + 1) * Cg].set(blk)
        bblk = jnp.concatenate([dbs[g][t] for t in range(n_tasks)],
                               axis=0).reshape(n_tasks * Ct, 1)
        b_dec = b_dec.at[g * n_tasks * Ct:(g + 1) * n_tasks * Ct, :].set(bblk)

    return {
        "packed": {"w_bb": w_bb, "b_bb": b_bb, "w_gr": w_gr, "b_gr": b_gr,
                   "w_dec": w_dec, "b_dec": b_dec},
        # group_matrix = ones + rand*eps with eps=0.0 -> ones(n_tasks, k_groups)
        "group_matrix": jnp.ones((n_tasks, k_groups), jnp.float32),
        "config": dict(Cin=Cin, Cb=Cb, Cg=Cg, Ct=Ct,
                       k_groups=k_groups, n_tasks=n_tasks),
    }


# Pure-JAX f32 reference of the fused chain (same packed weights), for checking.
def _reference_forward_T(patches_T, packed):
    xb = jnp.maximum(packed["w_bb"] @ patches_T + packed["b_bb"], 0.0)
    ft = jnp.maximum(packed["w_gr"] @ xb + packed["b_gr"], 0.0)
    return packed["w_dec"] @ ft + packed["b_dec"]


# ----------------------------------------------------------------------------
if __name__ == "__main__":
    key = jax.random.PRNGKey(0)
    k_in, k_par = jax.random.split(key)

    N, Cin, H, W = 2, 4, 16, 16
    x = jax.random.normal(k_in, (N, Cin, H, W), jnp.float32)
    params = make_params(k_par, Cin=Cin)
    cfg = params["config"]

    task_outputs, grouping, group_matrix = learn_to_group_forward(x, params)

    # block on everything
    jax.block_until_ready(grouping)
    for g_key in task_outputs:
        for t_key in task_outputs[g_key]:
            jax.block_until_ready(task_outputs[g_key][t_key])

    # sanity checks
    assert grouping.shape == (cfg["n_tasks"], cfg["k_groups"])
    assert abs(float(grouping.sum()) - cfg["n_tasks"]) < 1e-4       # rows sum to 1
    assert task_outputs["group_0"]["task_0"].shape == (N, cfg["Ct"], H, W)

    # numerical check against f32 reference (bf16 MXU inputs -> loose tolerance)
    patches_T = im2col_3x3_T(x)
    ref = _reference_forward_T(patches_T, params["packed"])
    got = fused_forward_T(patches_T, params["packed"])
    max_err = float(jnp.max(jnp.abs(got - ref)))
    assert max_err < 2e-2, f"max abs error vs f32 reference too large: {max_err}"

    print("KERNEL_OK")
</pallas_src>

<mosaic_0001>
module attributes {stable_mosaic.version = 11 : i64} {
  func.func @_fused_ltg_kernel(%arg0: i32, %arg1: memref<36x256xbf16, #tpu.memory_space<vmem>>, %arg2: memref<8x36xbf16, #tpu.memory_space<vmem>>, %arg3: memref<8x1xf32, #tpu.memory_space<vmem>>, %arg4: memref<16x8xbf16, #tpu.memory_space<vmem>>, %arg5: memref<16x1xf32, #tpu.memory_space<vmem>>, %arg6: memref<24x16xbf16, #tpu.memory_space<vmem>>, %arg7: memref<24x1xf32, #tpu.memory_space<vmem>>, %arg8: memref<24x256xf32, #tpu.memory_space<vmem>>) attributes {dimension_semantics = [#tpu.dimension_semantics<parallel>], iteration_bounds = array<i64: 2>, scalar_prefetch = 0 : i64, scratch_operands = 0 : i64, tpu.core_type = #tpu.core_type<tc>, window_params = [{transform_indices = @transform_0, window_bounds = array<i64: 36, 256>}, {pipeline_mode = #tpu.pipeline_mode<synchronous>, transform_indices = @transform_1, window_bounds = array<i64: 8, 36>}, {pipeline_mode = #tpu.pipeline_mode<synchronous>, transform_indices = @transform_2, window_bounds = array<i64: 8, 1>}, {pipeline_mode = #tpu.pipeline_mode<synchronous>, transform_indices = @transform_3, window_bounds = array<i64: 16, 8>}, {pipeline_mode = #tpu.pipeline_mode<synchronous>, transform_indices = @transform_4, window_bounds = array<i64: 16, 1>}, {pipeline_mode = #tpu.pipeline_mode<synchronous>, transform_indices = @transform_5, window_bounds = array<i64: 24, 16>}, {pipeline_mode = #tpu.pipeline_mode<synchronous>, transform_indices = @transform_6, window_bounds = array<i64: 24, 1>}, {transform_indices = @transform_7, window_bounds = array<i64: 24, 256>}]} {
    %c0 = arith.constant 0 : index
    %c0_0 = arith.constant 0 : index
    %0 = vector.load %arg1[%c0, %c0_0] : memref<36x256xbf16, #tpu.memory_space<vmem>>, vector<36x256xbf16>
    %c0_1 = arith.constant 0 : index
    %c0_2 = arith.constant 0 : index
    %1 = vector.load %arg2[%c0_1, %c0_2] : memref<8x36xbf16, #tpu.memory_space<vmem>>, vector<8x36xbf16>
    %cst = arith.constant dense<0.000000e+00> : vector<8x256xf32>
    %2 = tpu.matmul %1, %0, %cst {dimension_numbers = #tpu.dot_dimension_numbers<[1], [0], [0], [1], [0, 0, 1, 1], [], []>} : vector<8x36xbf16>, vector<36x256xbf16>, vector<8x256xf32> -> vector<8x256xf32>
    %c0_3 = arith.constant 0 : index
    %c0_4 = arith.constant 0 : index
    %3 = vector.load %arg3[%c0_3, %c0_4] : memref<8x1xf32, #tpu.memory_space<vmem>>, vector<8x1xf32>
    %4 = vector.broadcast %3 : vector<8x1xf32> to vector<8x256xf32>
    %5 = arith.addf %2, %4 : vector<8x256xf32>
    %cst_5 = arith.constant 0.000000e+00 : f32
    %6 = vector.broadcast %cst_5 : f32 to vector<8x256xf32>
    %7 = arith.maximumf %5, %6 : vector<8x256xf32>
    %8 = arith.truncf %7 : vector<8x256xf32> to vector<8x256xbf16>
    %c0_6 = arith.constant 0 : index
    %c0_7 = arith.constant 0 : index
    %9 = vector.load %arg4[%c0_6, %c0_7] : memref<16x8xbf16, #tpu.memory_space<vmem>>, vector<16x8xbf16>
    %cst_8 = arith.constant dense<0.000000e+00> : vector<16x256xf32>
    %10 = tpu.matmul %9, %8, %cst_8 {dimension_numbers = #tpu.dot_dimension_numbers<[1], [0], [0], [1], [0, 0, 1, 1], [], []>} : vector<16x8xbf16>, vector<8x256xbf16>, vector<16x256xf32> -> vector<16x256xf32>
    %c0_9 = arith.constant 0 : index
    %c0_10 = arith.constant 0 : index
    %11 = vector.load %arg5[%c0_9, %c0_10] : memref<16x1xf32, #tpu.memory_space<vmem>>, vector<16x1xf32>
    %12 = vector.broadcast %11 : vector<16x1xf32> to vector<16x256xf32>
    %13 = arith.addf %10, %12 : vector<16x256xf32>
    %cst_11 = arith.constant 0.000000e+00 : f32
    %14 = vector.broadcast %cst_11 : f32 to vector<16x256xf32>
    %15 = arith.maximumf %13, %14 : vector<16x256xf32>
    %16 = arith.truncf %15 : vector<16x256xf32> to vector<16x256xbf16>
    %c0_12 = arith.constant 0 : index
    %c0_13 = arith.constant 0 : index
    %17 = vector.load %arg6[%c0_12, %c0_13] : memref<24x16xbf16, #tpu.memory_space<vmem>>, vector<24x16xbf16>
    %cst_14 = arith.constant dense<0.000000e+00> : vector<24x256xf32>
    %18 = tpu.matmul %17, %16, %cst_14 {dimension_numbers = #tpu.dot_dimension_numbers<[1], [0], [0], [1], [0, 0, 1, 1], [], []>} : vector<24x16xbf16>, vector<16x256xbf16>, vector<24x256xf32> -> vector<24x256xf32>
    %c0_15 = arith.constant 0 : index
    %c0_16 = arith.constant 0 : index
    %19 = vector.load %arg7[%c0_15, %c0_16] : memref<24x1xf32, #tpu.memory_space<vmem>>, vector<24x1xf32>
    %20 = vector.broadcast %19 : vector<24x1xf32> to vector<24x256xf32>
    %21 = arith.addf %18, %20 : vector<24x256xf32>
    %c0_17 = arith.constant 0 : index
    %c0_18 = arith.constant 0 : index
    %22 = vector.load %arg8[%c0_17, %c0_18] : memref<24x256xf32, #tpu.memory_space<vmem>>, vector<24x256xf32>
    tpu.vector_store %arg8[%c0_17, %c0_18], %21 {strides = array<i32>} : memref<24x256xf32, #tpu.memory_space<vmem>>, vector<24x256xf32>,
    return
  }
  func.func @transform_0(%arg0: i32) -> (i32, i32) {
    %c0_i32 = arith.constant 0 : i32
    %c0_i32_0 = arith.constant 0 : i32
    return %c0_i32, %arg0 : i32, i32
  }
  func.func @transform_1(%arg0: i32) -> (i32, i32) {
    %c0_i32 = arith.constant 0 : i32
    %c0_i32_0 = arith.constant 0 : i32
    %c0_i32_1 = arith.constant 0 : i32
    return %c0_i32, %c0_i32_0 : i32, i32
  }
  func.func @transform_2(%arg0: i32) -> (i32, i32) {
    %c0_i32 = arith.constant 0 : i32
    %c0_i32_0 = arith.constant 0 : i32
    %c0_i32_1 = arith.constant 0 : i32
    return %c0_i32, %c0_i32_0 : i32, i32
  }
  func.func @transform_3(%arg0: i32) -> (i32, i32) {
    %c0_i32 = arith.constant 0 : i32
    %c0_i32_0 = arith.constant 0 : i32
    %c0_i32_1 = arith.constant 0 : i32
    return %c0_i32, %c0_i32_0 : i32, i32
  }
  func.func @transform_4(%arg0: i32) -> (i32, i32) {
    %c0_i32 = arith.constant 0 : i32
    %c0_i32_0 = arith.constant 0 : i32
    %c0_i32_1 = arith.constant 0 : i32
    return %c0_i32, %c0_i32_0 : i32, i32
  }
  func.func @transform_5(%arg0: i32) -> (i32, i32) {
    %c0_i32 = arith.constant 0 : i32
    %c0_i32_0 = arith.constant 0 : i32
    %c0_i32_1 = arith.constant 0 : i32
    return %c0_i32, %c0_i32_0 : i32, i32
  }
  func.func @transform_6(%arg0: i32) -> (i32, i32) {
    %c0_i32 = arith.constant 0 : i32
    %c0_i32_0 = arith.constant 0 : i32
    %c0_i32_1 = arith.constant 0 : i32
    return %c0_i32, %c0_i32_0 : i32, i32
  }
  func.func @transform_7(%arg0: i32) -> (i32, i32) {
    %c0_i32 = arith.constant 0 : i32
    %c0_i32_0 = arith.constant 0 : i32
    return %c0_i32, %arg0 : i32, i32
  }
}

</mosaic_0001>

<llo_original>
// kernel: tpu_custom_call.1
$region0: #{tpu_custom_call.1}
  #allocation0 [shape = 'u32[]', space=smem, size = 0x4, offset = 0x4, fixed_abs, tag = 'smem constant byte address 0x4 - core index']
  #allocation1 [shape = 'u32[144,128]{1,0:T(1,128)}', space=vmem, size = 0x12000, scoped, tag = 'internal scratch']
  %s0 = inlined_call_operand.vmem [shape: bf16[36,512], index: 0, kind: input, shape index: {}]
  %s1 = inlined_call_operand.hbm [shape: bf16[8,36], index: 1, kind: input, shape index: {}]
  %s2 = inlined_call_operand.vmem [shape: f32[8,1], index: 2, kind: input, shape index: {}]
  %s3 = inlined_call_operand.vmem [shape: bf16[16,8], index: 3, kind: input, shape index: {}]
  %s4 = inlined_call_operand.vmem [shape: f32[16,1], index: 4, kind: input, shape index: {}]
  %s5 = inlined_call_operand.vmem [shape: bf16[24,16], index: 5, kind: input, shape index: {}]
  %s6 = inlined_call_operand.vmem [shape: f32[24,1], index: 6, kind: input, shape index: {}]
  %s7 = inlined_call_operand.hbm [shape: f32[24,512], index: 7, kind: output, shape index: {}]
  %s8 = sld [smem:[#allocation0]]
  $region103: #{tpu_custom_call.1} parent=0
    _
  %s10 = ssub.s32 1, %s8
  %s11 = scalar_select 0, %s10, %s8
  $region1: #{tpu_custom_call.1} parent=0
    #allocation2 [shape = 'u8[40960]{0}', space=vmem, size = 0xa000, scoped, tag = 'input window, operand 0']
    #allocation3 [shape = 'u8[2048]{0}', space=vmem, size = 0x800, scoped, tag = 'input window, operand 1, single buffered']
    #allocation4 [shape = 's32[2]{0}', space=sflag, size = 0x8, scoped, tag = 'scoped memory for tpu_custom_call.1']
    #allocation5 [shape = 's32[2]{0}', space=sflag, size = 0x8, scoped, tag = 'scoped memory for tpu_custom_call.1']
    #allocation6 [shape = 'u8[49152]{0}', space=vmem, size = 0xc000, scoped, tag = 'output window, operand 0']
    %12 = vsyncpa [#allocation4], 0
    %13 = vsyncpa [#allocation5], 0
    %s14 = scalar_lea.sflag [#allocation5], 1
    %15 = vsyncpa %s14, 0
    loop: start=0, step=1, limit=4
    $region2: #{tpu_custom_call.1} parent=1 // loop_pre_header
      _
    $region3: #{tpu_custom_call.1} parent=1 // loop_header
      %s17 = sphi 0, %s21
      %p18 = scmp.ge.s32.totalorder %s17, 4
      %s27 = sphi 0, %s29
      %s30 = sphi 0, %s27
      %s31 = sphi 0, %s30
      %s47 = sphi 0, %s31
      %s51 = sphi 0, %s51
      %s53 = sphi 0, %s51
      %s54 = sphi 0, %s53
      %s68 = sphi 0, %s54
      %s72 = sphi 0, %s72
      %s74 = sphi 0, %s72
      %s75 = sphi 0, %s74
      %s89 = sphi 0, %s75
      %s93 = sphi 0, %s93
      %s95 = sphi 0, %s93
      %s96 = sphi 0, %s95
      %s110 = sphi 0, %s96
      %s114 = sphi 0, %s114
      %s116 = sphi 0, %s114
      %s117 = sphi 0, %s116
      %s131 = sphi 0, %s117
      %s135 = sphi 0, %s135
      %s137 = sphi 0, %s135
      %s138 = sphi 0, %s137
      %s152 = sphi 0, %s138
      %s156 = sphi 0, %s156
      %s158 = sphi 0, %s156
      %s159 = sphi 0, %s158
      %s173 = sphi 0, %s159
      %s179 = sphi 0, %s181
      %s182 = sphi 0, %s179
      %s183 = sphi 0, %s182
      %s199 = sphi 0, %s183
    $region4: #{tpu_custom_call.1} parent=1 // loop_header_branch
      %20 = sbr.rel (%p18) target = $region8
    $region5: #{tpu_custom_call.1} parent=1 // loop_body
      %s22 = ssub.s32 %s17, 1
      %s23 = ssub.s32 %s17, 2
      %s24 = sadd.s32 %s17, 1
      %s25 = ssub.s32 %s17, %s24
      %p26 = scmp.eq.s32.totalorder %s25, 0
      %s28 = sadd.s32 %s27, 1
      %s29 = scalar_select %p26, %s27, %s28
      %p32 = pneg %p26
      %p33 = scmp.eq.s32.totalorder %s17, 1
      %p34 = por %p32, %p33
      %p35 = scmp.ne.s32.totalorder %s27, %s30
      %p36 = scmp.eq.s32.totalorder %s17, 0
      %p37 = por %p35, %p36
      %p38 = scmp.ne.s32.totalorder %s27, %s30
      %p39 = scmp.eq.s32.totalorder %s22, 1
      %p40 = por %p38, %p39
      %p41 = scmp.ne.s32.totalorder %s30, %s31
      %p42 = scmp.eq.s32.totalorder %s22, 0
      %p43 = por %p41, %p42
      %p44 = scmp.ne.s32.totalorder %s30, %s31
      %p45 = scmp.eq.s32.totalorder %s23, 1
      %p46 = por %p44, %p45
      %p48 = scmp.ne.s32.totalorder %s31, %s47
      %p49 = scmp.eq.s32.totalorder %s23, 0
      %p50 = por %p48, %p49
      %s52 = sadd.s32 %s51, 1
      %p55 = scmp.eq.s32.totalorder %s17, 1
      %p56 = scmp.ne.s32.totalorder %s51, %s53
      %p57 = scmp.eq.s32.totalorder %s17, 0
      %p58 = por %p56, %p57
      %p59 = scmp.ne.s32.totalorder %s51, %s53
      %p60 = scmp.eq.s32.totalorder %s22, 1
      %p61 = por %p59, %p60
      %p62 = scmp.ne.s32.totalorder %s53, %s54
      %p63 = scmp.eq.s32.totalorder %s22, 0
      %p64 = por %p62, %p63
      %p65 = scmp.ne.s32.totalorder %s53, %s54
      %p66 = scmp.eq.s32.totalorder %s23, 1
      %p67 = por %p65, %p66
      %p69 = scmp.ne.s32.totalorder %s54, %s68
      %p70 = scmp.eq.s32.totalorder %s23, 0
      %p71 = por %p69, %p70
      %s73 = sadd.s32 %s72, 1
      %p76 = scmp.eq.s32.totalorder %s17, 1
      %p77 = scmp.ne.s32.totalorder %s72, %s74
      %p78 = scmp.eq.s32.totalorder %s17, 0
      %p79 = por %p77, %p78
      %p80 = scmp.ne.s32.totalorder %s72, %s74
      %p81 = scmp.eq.s32.totalorder %s22, 1
      %p82 = por %p80, %p81
      %p83 = scmp.ne.s32.totalorder %s74, %s75
      %p84 = scmp.eq.s32.totalorder %s22, 0
      %p85 = por %p83, %p84
      %p86 = scmp.ne.s32.totalorder %s74, %s75
      %p87 = scmp.eq.s32.totalorder %s23, 1
      %p88 = por %p86, %p87
      %p90 = scmp.ne.s32.totalorder %s75, %s89
      %p91 = scmp.eq.s32.totalorder %s23, 0
      %p92 = por %p90, %p91
      %s94 = sadd.s32 %s93, 1
      %p97 = scmp.eq.s32.totalorder %s17, 1
      %p98 = scmp.ne.s32.totalorder %s93, %s95
      %p99 = scmp.eq.s32.totalorder %s17, 0
      %p100 = por %p98, %p99
      %p101 = scmp.ne.s32.totalorder %s93, %s95
      %p102 = scmp.eq.s32.totalorder %s22, 1
      %p103 = por %p101, %p102
      %p104 = scmp.ne.s32.totalorder %s95, %s96
      %p105 = scmp.eq.s32.totalorder %s22, 0
      %p106 = por %p104, %p105
      %p107 = scmp.ne.s32.totalorder %s95, %s96
      %p108 = scmp.eq.s32.totalorder %s23, 1
      %p109 = por %p107, %p108
      %p111 = scmp.ne.s32.totalorder %s96, %s110
      %p112 = scmp.eq.s32.totalorder %s23, 0
      %p113 = por %p111, %p112
      %s115 = sadd.s32 %s114, 1
      %p118 = scmp.eq.s32.totalorder %s17, 1
      %p119 = scmp.ne.s32.totalorder %s114, %s116
      %p120 = scmp.eq.s32.totalorder %s17, 0
      %p121 = por %p119, %p120
      %p122 = scmp.ne.s32.totalorder %s114, %s116
      %p123 = scmp.eq.s32.totalorder %s22, 1
      %p124 = por %p122, %p123
      %p125 = scmp.ne.s32.totalorder %s116, %s117
      %p126 = scmp.eq.s32.totalorder %s22, 0
      %p127 = por %p125, %p126
      %p128 = scmp.ne.s32.totalorder %s116, %s117
      %p129 = scmp.eq.s32.totalorder %s23, 1
      %p130 = por %p128, %p129
      %p132 = scmp.ne.s32.totalorder %s117, %s131
      %p133 = scmp.eq.s32.totalorder %s23, 0
      %p134 = por %p132, %p133
      %s136 = sadd.s32 %s135, 1
      %p139 = scmp.eq.s32.totalorder %s17, 1
      %p140 = scmp.ne.s32.totalorder %s135, %s137
      %p141 = scmp.eq.s32.totalorder %s17, 0
      %p142 = por %p140, %p141
      %p143 = scmp.ne.s32.totalorder %s135, %s137
      %p144 = scmp.eq.s32.totalorder %s22, 1
      %p145 = por %p143, %p144
      %p146 = scmp.ne.s32.totalorder %s137, %s138
      %p147 = scmp.eq.s32.totalorder %s22, 0
      %p148 = por %p146, %p147
      %p149 = scmp.ne.s32.totalorder %s137, %s138
      %p150 = scmp.eq.s32.totalorder %s23, 1
      %p151 = por %p149, %p150
      %p153 = scmp.ne.s32.totalorder %s138, %s152
      %p154 = scmp.eq.s32.totalorder %s23, 0
      %p155 = por %p153, %p154
      %s157 = sadd.s32 %s156, 1
      %p160 = scmp.eq.s32.totalorder %s17, 1
      %p161 = scmp.ne.s32.totalorder %s156, %s158
      %p162 = scmp.eq.s32.totalorder %s17, 0
      %p163 = por %p161, %p162
      %p164 = scmp.ne.s32.totalorder %s156, %s158
      %p165 = scmp.eq.s32.totalorder %s22, 1
      %p166 = por %p164, %p165
      %p167 = scmp.ne.s32.totalorder %s158, %s159
      %p168 = scmp.eq.s32.totalorder %s22, 0
      %p169 = por %p167, %p168
      %p170 = scmp.ne.s32.totalorder %s158, %s159
      %p171 = scmp.eq.s32.totalorder %s23, 1
      %p172 = por %p170, %p171
      %p174 = scmp.ne.s32.totalorder %s159, %s173
      %p175 = scmp.eq.s32.totalorder %s23, 0
      %p176 = por %p174, %p175
      %s177 = ssub.s32 %s17, %s24
      %p178 = scmp.eq.s32.totalorder %s177, 0
      %s180 = sadd.s32 %s179, 1
      %s181 = scalar_select %p178, %s179, %s180
      %p184 = pneg %p178
      %p185 = scmp.eq.s32.totalorder %s17, 1
      %p186 = por %p184, %p185
      %p187 = scmp.ne.s32.totalorder %s179, %s182
      %p188 = scmp.eq.s32.totalorder %s17, 0
      %p189 = por %p187, %p188
      %p190 = scmp.ne.s32.totalorder %s179, %s182
      %p191 = scmp.eq.s32.totalorder %s22, 1
      %p192 = por %p190, %p191
      %p193 = scmp.ne.s32.totalorder %s182, %s183
      %p194 = scmp.eq.s32.totalorder %s22, 0
      %p195 = por %p193, %p194
      %p196 = scmp.ne.s32.totalorder %s182, %s183
      %p197 = scmp.eq.s32.totalorder %s23, 1
      %p198 = por %p196, %p197
      %p200 = scmp.ne.s32.totalorder %s183, %s199
      %p201 = scmp.eq.s32.totalorder %s23, 0
      %p202 = por %p200, %p201
      %p203 = scmp.le.s32.totalorder 1, %s17
      %p204 = scmp.lt.s32.totalorder %s17, 3
      %p205 = pnand %p203, %p204
      %p206 = pneg %p205
      // Predicated region
      $region9: #{tpu_custom_call.1} parent=5 // pred_check
        _
      $region10: #{tpu_custom_call.1} parent=5 // pred_check_branch
        %208 = sbr.rel (%p205) target = $region12
      $region11: #{tpu_custom_call.1} parent=5 // pred_region
        %s209 = ssub.s32 %s17, 1
        // Predicated region
        $region13: #{tpu_custom_call.1} parent=11 // pred_check
          %p210 = pneg %p64
        $region14: #{tpu_custom_call.1} parent=11 // pred_check_branch
          %212 = sbr.rel (%p210) target = $region16
        $region15: #{tpu_custom_call.1} parent=11 // pred_region
          %s214 = ssub.s32 64, 64
          %215 = vsyncadd [#allocation4], %s214
          %s217 = sshll.u32 [#allocation3], 4
          %s218 = int_to_ptr.vmem [resolvable:$true] %s217
          %220 = dma.hbm_to_vmem [thread:$0]  %s1, 64, %s218, [#allocation4]
        $region16: #{tpu_custom_call.1} parent=11 // pred_fallthru
          _
        // Predicated region
        $region17: #{tpu_custom_call.1} parent=11 // pred_check
          %p221 = pneg %p85
        $region18: #{tpu_custom_call.1} parent=11 // pred_check_branch
          %223 = sbr.rel (%p221) target = $region20
        $region19: #{tpu_custom_call.1} parent=11 // pred_region
          _
        $region20: #{tpu_custom_call.1} parent=11 // pred_fallthru
          _
        // Predicated region
        $region21: #{tpu_custom_call.1} parent=11 // pred_check
          %p224 = pneg %p106
        $region22: #{tpu_custom_call.1} parent=11 // pred_check_branch
          %226 = sbr.rel (%p224) target = $region24
        $region23: #{tpu_custom_call.1} parent=11 // pred_region
          _
        $region24: #{tpu_custom_call.1} parent=11 // pred_fallthru
          _
        // Predicated region
        $region25: #{tpu_custom_call.1} parent=11 // pred_check
          %p227 = pneg %p127
        $region26: #{tpu_custom_call.1} parent=11 // pred_check_branch
          %229 = sbr.rel (%p227) target = $region28
        $region27: #{tpu_custom_call.1} parent=11 // pred_region
          _
        $region28: #{tpu_custom_call.1} parent=11 // pred_fallthru
          _
        // Predicated region
        $region29: #{tpu_custom_call.1} parent=11 // pred_check
          %p230 = pneg %p148
        $region30: #{tpu_custom_call.1} parent=11 // pred_check_branch
          %232 = sbr.rel (%p230) target = $region32
        $region31: #{tpu_custom_call.1} parent=11 // pred_region
          _
        $region32: #{tpu_custom_call.1} parent=11 // pred_fallthru
          _
        // Predicated region
        $region33: #{tpu_custom_call.1} parent=11 // pred_check
          %p233 = pneg %p169
        $region34: #{tpu_custom_call.1} parent=11 // pred_check_branch
          %235 = sbr.rel (%p233) target = $region36
        $region35: #{tpu_custom_call.1} parent=11 // pred_region
          _
        $region36: #{tpu_custom_call.1} parent=11 // pred_fallthru
          _
      $region12: #{tpu_custom_call.1} parent=5 // pred_fallthru
        _
      %p236 = scmp.lt.s32.totalorder %s17, 2
      // Predicated region
      $region37: #{tpu_custom_call.1} parent=5 // pred_check
        %p237 = pneg %p236
      $region38: #{tpu_custom_call.1} parent=5 // pred_check_branch
        %239 = sbr.rel (%p237) target = $region40
      $region39: #{tpu_custom_call.1} parent=5 // pred_region
        // Predicated region
        $region41: #{tpu_custom_call.1} parent=39 // pred_check
          %p240 = pneg %p37
        $region42: #{tpu_custom_call.1} parent=39 // pred_check_branch
          %242 = sbr.rel (%p240) target = $region44
        $region43: #{tpu_custom_call.1} parent=39 // pred_region
          %s243 = sand.u32 %s27, 1
          %s244 = sand.u32 %s27, 1
          %s245 = smul.addr %s244, 40
          %s246 = scalar_lea.vmem [#allocation2], %s245
          %s247 = smul.u32 2, %s17
          %s248 = smul.addr %s247, 4
          %s249 = scalar_lea.vmem %s0, %s248
          // Predicated region
          $region45: #{tpu_custom_call.1} parent=43 // pred_check
            _
          $region46: #{tpu_custom_call.1} parent=43 // pred_check_branch
            %251 = sbr.rel (0) target = $region48
          $region47: #{tpu_custom_call.1} parent=43 // pred_region
            // Predicated region
            $region49: #{tpu_custom_call.1} parent=47 // pred_check
              _
            $region50: #{tpu_custom_call.1} parent=47 // pred_check_branch
              %253 = sbr.rel (0) target = $region52
            $region51: #{tpu_custom_call.1} parent=47 // pred_region
              // Predicated region
              $region64: #{tpu_custom_call.1} parent=51 // pred_check
                _
              $region65: #{tpu_custom_call.1} parent=51 // pred_check_branch
                %276 = sbr.rel (0) target = $region67
              $region66: #{tpu_custom_call.1} parent=51 // pred_region
                loop: start=0, step=1, limit=1
                $region68: #{tpu_custom_call.1} parent=66 // loop_pre_header
                  _
                $region69: #{tpu_custom_call.1} parent=66 // loop_header
                  %s278 = sphi 0, %s282
                  %p279 = scmp.ge.s32.totalorder %s278, 1
                  %s283 = sphi %s249, %s249
                  %s284 = sphi %s246, %s246
                $region70: #{tpu_custom_call.1} parent=66 // loop_header_branch
                  %281 = sbr.rel (%p279) target = $region74
                $region71: #{tpu_custom_call.1} parent=66 // loop_body
                  %v285 = vld [vmem:[%s283] sm:$0xff]
                  %286 = vst [vmem:[%s284] sm:$0xff] %v285
                  %v287 = vld [vmem:[%s283 + $0x10] sm:$0xff]
                  %288 = vst [vmem:[%s284 + $0x8] sm:$0xff] %v287
                  %v289 = vld [vmem:[%s283 + $0x20] sm:$0xff]
                  %290 = vst [vmem:[%s284 + $0x10] sm:$0xff] %v289
                  %v291 = vld [vmem:[%s283 + $0x30] sm:$0xff]
                  %292 = vst [vmem:[%s284 + $0x18] sm:$0xff] %v291
                  %v293 = vld [vmem:[%s283 + $0x40] sm:$0xff]
                  %294 = vst [vmem:[%s284 + $0x20] sm:$0xff] %v293
                $region72: #{tpu_custom_call.1} parent=66 // loop_footer
                  %s282 = sadd.s32 1, %s278
                $region73: #{tpu_custom_call.1} parent=66 // loop_footer_branch
                  %277 = sbr.rel target = $region69
                $region74: #{tpu_custom_call.1} parent=66 // loop_exit
                  _
              $region67: #{tpu_custom_call.1} parent=51 // pred_fallthru
                _
              // Predicated region
              $region75: #{tpu_custom_call.1} parent=51 // pred_check
                _
              $region76: #{tpu_custom_call.1} parent=51 // pred_check_branch
                %296 = sbr.rel target = $region78
              $region77: #{tpu_custom_call.1} parent=51 // pred_region
                _
              $region78: #{tpu_custom_call.1} parent=51 // pred_fallthru
                _
            $region52: #{tpu_custom_call.1} parent=47 // pred_fallthru
              _
            // Predicated region
            $region53: #{tpu_custom_call.1} parent=47 // pred_check
              _
            $region54: #{tpu_custom_call.1} parent=47 // pred_check_branch
              %255 = sbr.rel target = $region56
            $region55: #{tpu_custom_call.1} parent=47 // pred_region
              loop: start=0, step=1, limit=1
              $region57: #{tpu_custom_call.1} parent=55 // loop_pre_header
                _
              $region58: #{tpu_custom_call.1} parent=55 // loop_header
                %s258 = sphi 0, %s262
                %p259 = scmp.ge.s32.totalorder %s258, 1
                %s263 = sphi %s249, %s249
                %s264 = sphi %s246, %s246
              $region59: #{tpu_custom_call.1} parent=55 // loop_header_branch
                %261 = sbr.rel (%p259) target = $region63
              $region60: #{tpu_custom_call.1} parent=55 // loop_body
                %v265 = vld [vmem:[%s263] sm:$0xff]
                %266 = vst [vmem:[%s264] sm:$0xff] %v265
                %v267 = vld [vmem:[%s263 + $0x10] sm:$0xff]
                %268 = vst [vmem:[%s264 + $0x8] sm:$0xff] %v267
                %v269 = vld [vmem:[%s263 + $0x20] sm:$0xff]
                %270 = vst [vmem:[%s264 + $0x10] sm:$0xff] %v269
                %v271 = vld [vmem:[%s263 + $0x30] sm:$0xff]
                %272 = vst [vmem:[%s264 + $0x18] sm:$0xff] %v271
                %v273 = vld [vmem:[%s263 + $0x40] sm:$0xff]
                %274 = vst [vmem:[%s264 + $0x20] sm:$0xff] %v273
              $region61: #{tpu_custom_call.1} parent=55 // loop_footer
                %s262 = sadd.s32 1, %s258
              $region62: #{tpu_custom_call.1} parent=55 // loop_footer_branch
                %257 = sbr.rel target = $region58
              $region63: #{tpu_custom_call.1} parent=55 // loop_exit
                _
            $region56: #{tpu_custom_call.1} parent=47 // pred_fallthru
              _
          $region48: #{tpu_custom_call.1} parent=43 // pred_fallthru
            _
          %297 = vnop
        $region44: #{tpu_custom_call.1} parent=39 // pred_fallthru
          _
      $region40: #{tpu_custom_call.1} parent=5 // pred_fallthru
        _
      %p298 = scmp.le.s32.totalorder 1, %s17
      %p299 = scmp.lt.s32.totalorder %s17, 3
      %p300 = pnand %p298, %p299
      %p301 = pneg %p300
      // Predicated region
      $region79: #{tpu_custom_call.1} parent=5 // pred_check
        _
      $region80: #{tpu_custom_call.1} parent=5 // pred_check_branch
        %303 = sbr.rel (%p300) target = $region82
      $region81: #{tpu_custom_call.1} parent=5 // pred_region
        %s304 = ssub.s32 %s17, 1
        %s305 = sand.u32 %s30, 1
        %s306 = sand.u32 %s30, 1
        %s307 = smul.addr %s306, 40
        %s308 = scalar_lea.vmem [#allocation2], %s307
        // Predicated region
        $region83: #{tpu_custom_call.1} parent=81 // pred_check
          %p309 = pneg %p43
        $region84: #{tpu_custom_call.1} parent=81 // pred_check_branch
          %311 = sbr.rel (%p309) target = $region86
        $region85: #{tpu_custom_call.1} parent=81 // pred_region
          _
        $region86: #{tpu_custom_call.1} parent=81 // pred_fallthru
          _
        // Predicated region
        $region87: #{tpu_custom_call.1} parent=81 // pred_check
          %p312 = pneg %p64
        $region88: #{tpu_custom_call.1} parent=81 // pred_check_branch
          %314 = sbr.rel (%p312) target = $region90
        $region89: #{tpu_custom_call.1} parent=81 // pred_region
          %315 = dma.done [#allocation4], 64
        $region90: #{tpu_custom_call.1} parent=81 // pred_fallthru
          _
        %s316 = sand.u32 %s30, 1
        %s317 = sand.u32 %s30, 1
        %s318 = smul.addr %s317, 40
        %s319 = scalar_lea.vmem [#allocation2], %s318
        %p320 = pneg %p43
        %p321 = pneg %p40
        %p322 = pneg %p64
        %p323 = pneg %p61
        %p324 = pneg %p85
        %p325 = pneg %p82
        %p326 = pneg %p106
        %p327 = pneg %p103
        %p328 = pneg %p127
        %p329 = pneg %p124
        %p330 = pneg %p148
        %p331 = pneg %p145
        %p332 = pneg %p169
        %p333 = pneg %p166
        %p334 = pneg %p195
        %p335 = pneg %p192
        %s336 = sand.u32 %s182, 1
        %s337 = scalar_lea.sflag [#allocation5], %s336
        %s338 = sand.u32 %s182, 1
        %s339 = smul.addr %s338, 48
        %s340 = scalar_lea.vmem [#allocation6], %s339
        %s341 = smul.u32 2, %s22
        %s342 = smul.u32 2, %s22
        %v344 = vld [vmem:[%s308] sm:$0xff]
        %v345 = vld [vmem:[%s308 + $0x8] sm:$0xff]
        %v346 = vld [vmem:[%s308 + $0x10] sm:$0xff]
        %v347 = vld [vmem:[%s308 + $0x18] sm:$0xff]
        %v348 = vld [vmem:[%s308 + $0x20] sm:$0x33]
        %v349 = vld [vmem:[#allocation3] sm:$0xf]
        %v350 = vld [vmem:[%s2] sm:$0xff]
        %352 = vset.pattern.permute.xlu0 0
        %353 = vperm.xlu0 %352, %v350
        %v354 = vpop.permute.xlu0 %353
        %v361 = vunpack.c.l.b16 %v344
        %v362 = vunpack.c.h.b16 %v344
        %v363 = vunpack.c.l.b16 %v345
        %v364 = vunpack.c.h.b16 %v345
        %v365 = vunpack.c.l.b16 %v346
        %v366 = vunpack.c.h.b16 %v346
        %v367 = vunpack.c.l.b16 %v347
        %v368 = vunpack.c.h.b16 %v347
        %v369 = vunpack.c.l.b16 %v348
        %v370 = vunpack.c.h.b16 %v348
        %v371 = vpack.c.b16 %v363, %v361
        %v372 = vpack.c.b16 %v364, %v362
        %v373 = vpack.c.b16 %v367, %v365
        %v374 = vpack.c.b16 %v368, %v366
        %v375 = vpack.c.b16 %v369, %v369
        %v376 = vpack.c.b16 %v370, %v370
        %vm381 = vcmask 293888
        %v383 = vsel %vm381, %v349, 0
        %vm385 = vcmask 1041408
        %v387 = vsel %vm385, %v375, 0
        %v390 = vsel %vm385, %v376, 0
        %392 = vmatprep.subr.bf16.mxu0 %v372
        %393 = vmatpush1.bf16.msra.mxu0 %v371
        %394 = vmatprep.subr.bf16.mxu0 %v374
        %395 = vmatpush1.bf16.msra.mxu0 %v373
        %396 = vmatprep.subr.bf16.mxu0 %v390
        %397 = vmatpush1.bf16.msra.mxu0 %v387
        %398 = vmatprep.subr.bf16.mxu0 0
        %399 = vmatpush1.bf16.msra.mxu0 0
        %400 = vmatprep.subr.bf16.mxu0 0
        %401 = vmatpush1.bf16.msra.mxu0 0
        %402 = vmatprep.subr.bf16.mxu0 0
        %403 = vmatpush1.bf16.msra.mxu0 0
        %404 = vmatprep.subr.bf16.mxu0 0
        %405 = vmatpush1.bf16.msra.mxu0 0
        %406 = vmatprep.subr.bf16.mxu0 0
        %407 = vmatpush1.bf16.msra.mxu0 0
        %408 = vmatprep.subr.bf16.mxu0 0
        %409 = vmatpush1.bf16.msra.mxu0 0
        %410 = vmatprep.subr.bf16.mxu0 0
        %411 = vmatpush1.bf16.msra.mxu0 0
        %412 = vmatprep.subr.bf16.mxu0 0
        %413 = vmatpush1.bf16.msra.mxu0 0
        %414 = vmatprep.subr.bf16.mxu0 0
        %415 = vmatpush1.bf16.msra.mxu0 0
        %416 = vmatprep.subr.bf16.mxu0 0
        %417 = vmatpush1.bf16.msra.mxu0 0
        %418 = vmatprep.subr.bf16.mxu0 0
        %419 = vmatpush1.bf16.msra.mxu0 0
        %420 = vmatprep.subr.bf16.mxu0 0
        %421 = vmatpush1.bf16.msra.mxu0 0
        %422 = vmatprep.subr.bf16.mxu0 0
        %423 = vmatpush1.bf16.msra.mxu0 0
        %424 = vmatprep.mubr.bf16.mxu0 0
        %425 = vmatmul.mubr.bf16.gmra.mrb[0].mxu0 %v383
        %v426 = vpop.f32.mrb[0].mxu0
        %v427 = vadd.f32 %v354, %v426
        %v428 = vpop.f32.mrb[0].mxu0
        %v429 = vadd.f32 %v354, %v428
        %v430 = vpop.f32.mrb[0].mxu0
        %v431 = vpop.f32.mrb[0].mxu0
        %432 = vdwg.mxu0
        %v433 = vmax.f32 %v427, 0.0
        %v434 = vmax.f32 %v429, 0.0
        %v435 = vpack.c.bf16 %v433, %v433
        %v436 = vpack.c.bf16 %v434, %v434
        %v437 = vld [vmem:[%s3] sm:$0xf]
        %v438 = vld [vmem:[%s3 + $0x4] sm:$0xf]
        %v439 = vld [vmem:[%s4] sm:$0xff]
        %v440 = vld [vmem:[%s4 + $0x8] sm:$0xff]
        %442 = vset.pattern.permute.xlu0 0
        %443 = vperm.xlu0 %442, %v439
        %v444 = vpop.permute.xlu0 %443
        %447 = vset.pattern.permute.xlu0 0
        %448 = vperm.xlu0 %447, %v440
        %v449 = vpop.permute.xlu0 %448
        %v453 = vunpack.c.l.b16 %v437
        %v454 = vunpack.c.l.b16 %v438
        %v455 = vpack.c.b16 %v454, %v453
        %vm456 = vcmask 64512
        %v458 = vsel %vm456, %v455, 0
        %vm460 = vcmask 1043456
        %v462 = vsel %vm460, %v435, 0
        %v465 = vsel %vm460, %v436, 0
        %467 = vmatprep.subr.bf16.mxu0 %v465
        %468 = vmatpush1.bf16.msra.mxu0 %v462
        %469 = vmatprep.subr.bf16.mxu0 0
        %470 = vmatpush1.bf16.msra.mxu0 0
        %471 = vmatprep.subr.bf16.mxu0 0
        %472 = vmatpush1.bf16.msra.mxu0 0
        %473 = vmatprep.subr.bf16.mxu0 0
        %474 = vmatpush1.bf16.msra.mxu0 0
        %475 = vmatprep.subr.bf16.mxu0 0
        %476 = vmatpush1.bf16.msra.mxu0 0
        %477 = vmatprep.subr.bf16.mxu0 0
        %478 = vmatpush1.bf16.msra.mxu0 0
        %479 = vmatprep.subr.bf16.mxu0 0
        %480 = vmatpush1.bf16.msra.mxu0 0
        %481 = vmatprep.subr.bf16.mxu0 0
        %482 = vmatpush1.bf16.msra.mxu0 0
        %483 = vmatprep.subr.bf16.mxu0 0
        %484 = vmatpush1.bf16.msra.mxu0 0
        %485 = vmatprep.subr.bf16.mxu0 0
        %486 = vmatpush1.bf16.msra.mxu0 0
        %487 = vmatprep.subr.bf16.mxu0 0
        %488 = vmatpush1.bf16.msra.mxu0 0
        %489 = vmatprep.subr.bf16.mxu0 0
        %490 = vmatpush1.bf16.msra.mxu0 0
        %491 = vmatprep.subr.bf16.mxu0 0
        %492 = vmatpush1.bf16.msra.mxu0 0
        %493 = vmatprep.subr.bf16.mxu0 0
        %494 = vmatpush1.bf16.msra.mxu0 0
        %495 = vmatprep.subr.bf16.mxu0 0
        %496 = vmatpush1.bf16.msra.mxu0 0
        %497 = vmatprep.subr.bf16.mxu0 0
        %498 = vmatpush1.bf16.msra.mxu0 0
        %499 = vmatprep.mubr.bf16.mxu0 0
        %500 = vmatmul.mubr.bf16.gmra.mrb[0].mxu0 %v458
        %v501 = vpop.f32.mrb[0].mxu0
        %v502 = vadd.f32 %v444, %v501
        %v503 = vpop.f32.mrb[0].mxu0
        %v504 = vadd.f32 %v444, %v503
        %v505 = vpop.f32.mrb[0].mxu0
        %v506 = vadd.f32 %v449, %v505
        %v507 = vpop.f32.mrb[0].mxu0
        %v508 = vadd.f32 %v449, %v507
        %509 = vdwg.mxu0
        %v510 = vmax.f32 %v502, 0.0
        %v511 = vmax.f32 %v504, 0.0
        %v512 = vmax.f32 %v506, 0.0
        %v513 = vmax.f32 %v508, 0.0
        %v514 = vpack.c.bf16 %v512, %v510
        %v515 = vpack.c.bf16 %v513, %v511
        %v516 = vld [vmem:[%s5] sm:$0xf]
        %v517 = vld [vmem:[%s5 + $0x4] sm:$0xf]
        %v518 = vld [vmem:[%s5 + $0x8] sm:$0xf]
        %v519 = vld [vmem:[%s6] sm:$0xff]
        %v520 = vld [vmem:[%s6 + $0x8] sm:$0xff]
        %v521 = vld [vmem:[%s6 + $0x10] sm:$0xff]
        %523 = vset.pattern.permute.xlu0 0
        %524 = vperm.xlu0 %523, %v519
        %v525 = vpop.permute.xlu0 %524
        %528 = vset.pattern.permute.xlu0 0
        %529 = vperm.xlu0 %528, %v520
        %v530 = vpop.permute.xlu0 %529
        %533 = vset.pattern.permute.xlu0 0
        %534 = vperm.xlu0 %533, %v521
        %v535 = vpop.permute.xlu0 %534
        %v540 = vunpack.c.l.b16 %v516
        %v541 = vunpack.c.l.b16 %v517
        %v542 = vunpack.c.l.b16 %v518
        %v543 = vpack.c.b16 %v541, %v540
        %v544 = vpack.c.b16 %v542, %v542
        %vm545 = vcmask 130048
        %v547 = vsel %vm545, %v543, 0
        %v550 = vsel %vm545, %v544, 0
        %552 = vmatprep.subr.bf16.mxu0 %v515
        %553 = vmatpush1.bf16.msra.mxu0 %v514
        %554 = vmatprep.subr.bf16.mxu0 0
        %555 = vmatpush1.bf16.msra.mxu0 0
        %556 = vmatprep.subr.bf16.mxu0 0
        %557 = vmatpush1.bf16.msra.mxu0 0
        %558 = vmatprep.subr.bf16.mxu0 0
        %559 = vmatpush1.bf16.msra.mxu0 0
        %560 = vmatprep.subr.bf16.mxu0 0
        %561 = vmatpush1.bf16.msra.mxu0 0
        %562 = vmatprep.subr.bf16.mxu0 0
        %563 = vmatpush1.bf16.msra.mxu0 0
        %564 = vmatprep.subr.bf16.mxu0 0
        %565 = vmatpush1.bf16.msra.mxu0 0
        %566 = vmatprep.subr.bf16.mxu0 0
        %567 = vmatpush1.bf16.msra.mxu0 0
        %568 = vmatprep.subr.bf16.mxu0 0
        %569 = vmatpush1.bf16.msra.mxu0 0
        %570 = vmatprep.subr.bf16.mxu0 0
        %571 = vmatpush1.bf16.msra.mxu0 0
        %572 = vmatprep.subr.bf16.mxu0 0
        %573 = vmatpush1.bf16.msra.mxu0 0
        %574 = vmatprep.subr.bf16.mxu0 0
        %575 = vmatpush1.bf16.msra.mxu0 0
        %576 = vmatprep.subr.bf16.mxu0 0
        %577 = vmatpush1.bf16.msra.mxu0 0
        %578 = vmatprep.subr.bf16.mxu0 0
        %579 = vmatpush1.bf16.msra.mxu0 0
        %580 = vmatprep.subr.bf16.mxu0 0
        %581 = vmatpush1.bf16.msra.mxu0 0
        %582 = vmatprep.subr.bf16.mxu0 0
        %583 = vmatpush1.bf16.msra.mxu0 0
        %584 = vmatprep.mubr.bf16.mxu0 0
        %585 = vmatmul.mubr.bf16.gmra.mrb[0].mxu0 %v547
        %v586 = vpop.f32.mrb[0].mxu0
        %v587 = vadd.f32 %v525, %v586
        %v588 = vpop.f32.mrb[0].mxu0
        %v589 = vadd.f32 %v525, %v588
        %v590 = vpop.f32.mrb[0].mxu0
        %v591 = vadd.f32 %v530, %v590
        %v592 = vpop.f32.mrb[0].mxu0
        %v593 = vadd.f32 %v530, %v592
        %594 = vmatprep.mubr.bf16.mxu0 0
        %595 = vmatmul.mubr.bf16.gmra.mrb[0].mxu0 %v550
        %v596 = vpop.f32.mrb[0].mxu0
        %v597 = vadd.f32 %v535, %v596
        %v598 = vpop.f32.mrb[0].mxu0
        %v599 = vadd.f32 %v535, %v598
        %v600 = vpop.f32.mrb[0].mxu0
        %v601 = vpop.f32.mrb[0].mxu0
        %602 = vdwg.mxu0
        %603 = vst [vmem:[%s340] sm:$0xff] %v587
        %604 = vst [vmem:[%s340 + $0x8] sm:$0xff] %v589
        %605 = vst [vmem:[%s340 + $0x10] sm:$0xff] %v591
        %606 = vst [vmem:[%s340 + $0x18] sm:$0xff] %v593
        %607 = vst [vmem:[%s340 + $0x20] sm:$0xff] %v597
        %608 = vst [vmem:[%s340 + $0x28] sm:$0xff] %v599
        %s609 = sand.u32 %s182, 1
        %s610 = scalar_lea.sflag [#allocation5], %s609
        %s611 = sand.u32 %s182, 1
        %s612 = smul.addr %s611, 48
        %s613 = scalar_lea.vmem [#allocation6], %s612
        // Predicated region
        $region91: #{tpu_custom_call.1} parent=81 // pred_check
          %p614 = pneg %p192
        $region92: #{tpu_custom_call.1} parent=81 // pred_check_branch
          %616 = sbr.rel (%p614) target = $region94
        $region93: #{tpu_custom_call.1} parent=81 // pred_region
          %s617 = smul.u32 2, %s22
          %s619 = ssub.s32 768, 768
          %620 = vsyncadd %s610, %s619
          %s621 = smul.addr %s617, 128
          %s622 = scalar_lea.hbm %s7, %s621
          %s623 = sshll.u32 %s613, 4
          %s624 = int_to_ptr.vmem [resolvable:$true] %s623
          %629 = dma.vmem_to_hbm [thread:$0]  %s624, 768, %s622, %s610, 256, 512, 16
        $region94: #{tpu_custom_call.1} parent=81 // pred_fallthru
          _
      $region82: #{tpu_custom_call.1} parent=5 // pred_fallthru
        _
      %p630 = scmp.le.s32.totalorder 2, %s17
      // Predicated region
      $region95: #{tpu_custom_call.1} parent=5 // pred_check
        %p631 = pneg %p630
      $region96: #{tpu_custom_call.1} parent=5 // pred_check_branch
        %633 = sbr.rel (%p631) target = $region98
      $region97: #{tpu_custom_call.1} parent=5 // pred_region
        %s634 = ssub.s32 %s17, 2
        // Predicated region
        $region99: #{tpu_custom_call.1} parent=97 // pred_check
          %p635 = pneg %p198
        $region100: #{tpu_custom_call.1} parent=97 // pred_check_branch
          %637 = sbr.rel (%p635) target = $region102
        $region101: #{tpu_custom_call.1} parent=97 // pred_region
          %s638 = sand.u32 %s183, 1
          %s639 = scalar_lea.sflag [#allocation5], %s638
          %s640 = sand.u32 %s183, 1
          %s641 = smul.addr %s640, 48
          %s642 = scalar_lea.vmem [#allocation6], %s641
          %643 = dma.done %s639, 768
        $region102: #{tpu_custom_call.1} parent=97 // pred_fallthru
          _
      $region98: #{tpu_custom_call.1} parent=5 // pred_fallthru
        _
    $region6: #{tpu_custom_call.1} parent=1 // loop_footer
      %s21 = sadd.s32 1, %s17
    $region7: #{tpu_custom_call.1} parent=1 // loop_footer_branch
      %16 = sbr.rel target = $region3
    $region8: #{tpu_custom_call.1} parent=1 // loop_exit
      _
    %644 = vsyncpa [#allocation4], 1
    %s645 = scalar_lea.sflag [#allocation4], 1
    %646 = vsyncpa %s645, 1
    %647 = vsyncpa [#allocation5], 1
    %s648 = scalar_lea.sflag [#allocation5], 1
    %649 = vsyncpa %s648, 1

</llo_original>
